<compile_context>
chip_gen: v7x
topology: tpu7x:2x2x1
jax: 0.10.0
libtpu: 0.0.40
codegen_flags: <defaults>
</compile_context>

<pallas_src>
import jax
import jax.numpy as jnp
from jax.experimental import pallas as pl
from jax.experimental.pallas import tpu as pltpu

_LANE_WIDTH = 512          # lane-dense slabs: large multiple of 128 -> unmasked vst
_ROW_ALIGN = 16            # sublane alignment (also covers 16-bit sublane packing)
_SMALL_N = 1 << 16         # below this, XLA's fused multiply beats kernel overhead


def _round_up(n: int, m: int) -> int:
    return (n + m - 1) // m * m


def _vmem_budget():
    """(vmem_limit_bytes, max_rows_per_tile) tuned per TPU generation."""
    try:
        vmem = pltpu.get_tpu_info().vmem_capacity_bytes
    except Exception:
        vmem = 64 * 1024 * 1024                 # assume tightest (v7x per-TC)
    if vmem >= 100 * 1024 * 1024:               # v5e / v6e: 128 MiB VMEM
        return 96 * 1024 * 1024, 4096
    return 48 * 1024 * 1024, 1536               # v7x: 64 MiB VMEM per TC


def _tiling(n_flat: int, cols: int, max_rows: int):
    """Grid first, then tile size: avoids the old double-round-up padding blowup."""
    rows_needed = max(pl.cdiv(n_flat, cols), 1)
    grid_rows = pl.cdiv(rows_needed, max_rows)
    tile_rows = _round_up(pl.cdiv(rows_needed, grid_rows), _ROW_ALIGN)
    rows = grid_rows * tile_rows
    return rows, tile_rows, grid_rows


def _pad_to_slab(flat, rows: int, cols: int):
    pad = rows * cols - flat.shape[0]
    if pad:
        flat = jnp.pad(flat, (0, pad))
    return flat.reshape(rows, cols)


def _real_diag_mul_kernel(x_ref, d_ref, o_ref):
    # Inputs stream at native width (bf16/f16/f32); multiply in f32 (v5e's VPU
    # has no bf16 ALU), store directly in the promoted output dtype.
    x = x_ref[...].astype(jnp.float32)
    d = d_ref[...].astype(jnp.float32)
    o_ref[...] = (x * d).astype(o_ref.dtype)


def _complex_interleaved_mul_kernel(x_ref, d_ref, o_ref):
    # Tiles hold interleaved (re, im) float32 pairs along the lane axis:
    # even lane j -> Re(z_k), odd lane j -> Im(z_k) of the same complex element.
    x = x_ref[...]
    d = d_ref[...]
    cols = x.shape[-1]
    # Partner-lane values via XLU rotations (roll ≡ jnp.roll).  Pairs never
    # straddle the row edge because cols is even, so the circular wrap is safe.
    x_next = pltpu.roll(x, cols - 1, 1)   # [j] -> x[j + 1]
    d_next = pltpu.roll(d, cols - 1, 1)
    x_prev = pltpu.roll(x, 1, 1)          # [j] -> x[j - 1]
    d_prev = pltpu.roll(d, 1, 1)
    lane = jax.lax.broadcasted_iota(jnp.int32, x.shape, 1)
    is_real_lane = (lane & 1) == 0
    # (a+ib)(c+ie): even lane -> ac - be ; odd lane -> ae + bc
    real_part = x * d - x_next * d_next          # valid on even lanes
    imag_part = x_prev * d + x * d_prev          # valid on odd lanes
    o_ref[...] = jnp.where(is_real_lane, real_part, imag_part)


def diagonal_forward(diag, x, *, lane_width: int = _LANE_WIDTH,
                     min_elements_for_pallas: int = _SMALL_N,
                     core_parallel: bool = False):
    """Pallas implementation of DiagonalMatrixOperator.forward: diag * x."""
    assert x.shape == diag.shape, "diagonal_vector must have the same shape as x"
    orig_shape = x.shape
    n = x.size

    out_dtype = jnp.result_type(x.dtype, diag.dtype)
    is_complex = jnp.issubdtype(out_dtype, jnp.complexfloating)
    complex_ok = is_complex and out_dtype == jnp.complex64
    float_ok = (not is_complex and jnp.issubdtype(out_dtype, jnp.floating)
                and out_dtype.itemsize <= 4)

    if n == 0 or n < min_elements_for_pallas or not (complex_ok or float_ok):
        # Small tensors: kernel launch + pad passes dominate the multiply.
        # TODO(synk): integer / float64 / complex128 inputs stay on the XLA path.
        return diag * x

    vmem_limit, max_rows = _vmem_budget()
    cols = lane_width
    # core_parallel=True: explicit cross-TensorCore sharding of the row-tile
    # loop on v7x (2 TCs/chip); "parallel" is the safe default elsewhere.
    dims = (pltpu.CORE_PARALLEL,) if core_parallel else ("parallel",)
    compiler_params = pltpu.CompilerParams(
        dimension_semantics=dims, vmem_limit_bytes=vmem_limit)

    if is_complex:
        # Bitcast-like dtype view: complex64 -> interleaved float32 (re, im)
        # pairs along the last axis.  No separate real/imag/stack passes.
        x_f = x.astype(jnp.complex64).view(jnp.float32).reshape(-1)
        d_f = diag.astype(jnp.complex64).view(jnp.float32).reshape(-1)
        n_flat = 2 * n
        rows, tile_rows, grid_rows = _tiling(n_flat, cols, max_rows)
        x_slab = _pad_to_slab(x_f, rows, cols)
        d_slab = _pad_to_slab(d_f, rows, cols)
        slab_bytes = rows * cols * 4
        out = pl.pallas_call(
            _complex_interleaved_mul_kernel,
            out_shape=jax.ShapeDtypeStruct((rows, cols), jnp.float32),
            grid=(grid_rows,),
            in_specs=[pl.BlockSpec((tile_rows, cols), lambda i: (i, 0)),
                      pl.BlockSpec((tile_rows, cols), lambda i: (i, 0))],
            out_specs=pl.BlockSpec((tile_rows, cols), lambda i: (i, 0)),
            compiler_params=compiler_params,
            cost_estimate=pl.CostEstimate(
                flops=4 * n_flat, transcendentals=0,
                bytes_accessed=3 * slab_bytes),
            input_output_aliases={0: 0},   # donate padded x slab -> output slab
        )(x_slab, d_slab)
        out_flat = out.reshape(-1)[:n_flat]
        return out_flat.view(jnp.complex64).reshape(orig_shape)

    # Real-valued path: stream native dtypes, output promoted dtype directly.
    rows, tile_rows, grid_rows = _tiling(n, cols, max_rows)
    x_slab = _pad_to_slab(x.reshape(-1), rows, cols)
    d_slab = _pad_to_slab(diag.reshape(-1), rows, cols)
    bytes_accessed = rows * cols * (x_slab.dtype.itemsize
                                    + d_slab.dtype.itemsize
                                    + out_dtype.itemsize)
    aliases = {0: 0} if x_slab.dtype == out_dtype else {}
    out = pl.pallas_call(
        _real_diag_mul_kernel,
        out_shape=jax.ShapeDtypeStruct((rows, cols), out_dtype),
        grid=(grid_rows,),
        in_specs=[pl.BlockSpec((tile_rows, cols), lambda i: (i, 0)),
                  pl.BlockSpec((tile_rows, cols), lambda i: (i, 0))],
        out_specs=pl.BlockSpec((tile_rows, cols), lambda i: (i, 0)),
        compiler_params=compiler_params,
        cost_estimate=pl.CostEstimate(
            flops=n, transcendentals=0, bytes_accessed=bytes_accessed),
        input_output_aliases=aliases,
    )(x_slab, d_slab)
    return out.reshape(-1)[:n].reshape(orig_shape)


if __name__ == "__main__":
    key = jax.random.PRNGKey(0)
    k1, k2, k3, k4 = jax.random.split(key, 4)

    # [batch=2, channel=4, *input_shape=(16, 16)], complex64 per module docstring.
    shape = (2, 4, 16, 16)
    x = jax.lax.complex(jax.random.normal(k1, shape), jax.random.normal(k2, shape))
    diag = jax.lax.complex(jax.random.normal(k3, shape), jax.random.normal(k4, shape))

    # Force the Pallas path even at this small test size.
    fwd = jax.jit(lambda d, v: diagonal_forward(d, v, min_elements_for_pallas=0))

    out = jax.block_until_ready(fwd(diag, x))
    ref = diag * x
    assert out.shape == x.shape and out.dtype == jnp.complex64
    assert jnp.allclose(out, ref, atol=1e-5, rtol=1e-5), "complex mismatch vs reference"

    # Real bf16 path: native-width streaming + in-kernel f32 upcast.
    xb = jax.random.normal(k1, shape, dtype=jnp.bfloat16)
    db = jax.random.normal(k3, shape, dtype=jnp.bfloat16)
    outb = jax.block_until_ready(fwd(db, xb))
    refb = (db.astype(jnp.float32) * xb.astype(jnp.float32)).astype(jnp.bfloat16)
    assert outb.shape == shape and outb.dtype == jnp.bfloat16
    assert jnp.allclose(outb.astype(jnp.float32), refb.astype(jnp.float32),
                        atol=1e-2, rtol=1e-2), "bf16 mismatch vs reference"

    # Default small-input fast path (pure XLA) still matches.
    out_small = jax.block_until_ready(jax.jit(diagonal_forward)(diag, x))
    assert jnp.allclose(out_small, ref, atol=1e-5, rtol=1e-5), "fast-path mismatch"

    print("KERNEL_OK")
</pallas_src>

<mosaic_0001>
module attributes {stable_mosaic.version = 11 : i64} {
  func.func @_complex_interleaved_mul_kernel(%arg0: i32, %arg1: memref<16x512xf32, #tpu.memory_space<vmem>>, %arg2: memref<16x512xf32, #tpu.memory_space<vmem>>, %arg3: memref<16x512xf32, #tpu.memory_space<vmem>>) attributes {dimension_semantics = [#tpu.dimension_semantics<parallel>], iteration_bounds = array<i64: 1>, scalar_prefetch = 0 : i64, scratch_operands = 0 : i64, tpu.core_type = #tpu.core_type<tc>, window_params = [{transform_indices = @transform_0, window_bounds = array<i64: 16, 512>}, {transform_indices = @transform_1, window_bounds = array<i64: 16, 512>}, {transform_indices = @transform_2, window_bounds = array<i64: 16, 512>}]} {
    %c0 = arith.constant 0 : index
    %c0_0 = arith.constant 0 : index
    %0 = vector.load %arg1[%c0, %c0_0] : memref<16x512xf32, #tpu.memory_space<vmem>>, vector<16x512xf32>
    %c0_1 = arith.constant 0 : index
    %c0_2 = arith.constant 0 : index
    %1 = vector.load %arg2[%c0_1, %c0_2] : memref<16x512xf32, #tpu.memory_space<vmem>>, vector<16x512xf32>
    %c511_i32 = arith.constant 511 : i32
    %2 = tpu.dynamic_rotate %0 by %c511_i32 dim 1 : vector<16x512xf32>, i32 -> vector<16x512xf32>
    %c511_i32_3 = arith.constant 511 : i32
    %3 = tpu.dynamic_rotate %1 by %c511_i32_3 dim 1 : vector<16x512xf32>, i32 -> vector<16x512xf32>
    %c1_i32 = arith.constant 1 : i32
    %4 = tpu.dynamic_rotate %0 by %c1_i32 dim 1 : vector<16x512xf32>, i32 -> vector<16x512xf32>
    %c1_i32_4 = arith.constant 1 : i32
    %5 = tpu.dynamic_rotate %1 by %c1_i32_4 dim 1 : vector<16x512xf32>, i32 -> vector<16x512xf32>
    %6 = tpu.iota {dimensions = array<i32: 1>} : vector<16x512xi32>
    %c1_i32_5 = arith.constant 1 : i32
    %7 = vector.broadcast %c1_i32_5 : i32 to vector<16x512xi32>
    %8 = arith.andi %6, %7 : vector<16x512xi32>
    %c0_i32 = arith.constant 0 : i32
    %9 = vector.broadcast %c0_i32 : i32 to vector<16x512xi32>
    %10 = arith.cmpi eq, %8, %9 : vector<16x512xi32>
    %11 = arith.mulf %0, %1 : vector<16x512xf32>
    %12 = arith.mulf %2, %3 : vector<16x512xf32>
    %13 = arith.subf %11, %12 : vector<16x512xf32>
    %14 = arith.mulf %4, %1 : vector<16x512xf32>
    %15 = arith.mulf %0, %5 : vector<16x512xf32>
    %16 = arith.addf %14, %15 : vector<16x512xf32>
    %17 = arith.select %10, %13, %16 : vector<16x512xi1>, vector<16x512xf32>
    %c0_6 = arith.constant 0 : index
    %c0_7 = arith.constant 0 : index
    %18 = vector.load %arg3[%c0_6, %c0_7] : memref<16x512xf32, #tpu.memory_space<vmem>>, vector<16x512xf32>
    tpu.vector_store %arg3[%c0_6, %c0_7], %17 {strides = array<i32>} : memref<16x512xf32, #tpu.memory_space<vmem>>, vector<16x512xf32>,
    return
  }
  func.func @transform_0(%arg0: i32) -> (i32, i32) {
    %c0_i32 = arith.constant 0 : i32
    %c0_i32_0 = arith.constant 0 : i32
    return %arg0, %c0_i32 : i32, i32
  }
  func.func @transform_1(%arg0: i32) -> (i32, i32) {
    %c0_i32 = arith.constant 0 : i32
    %c0_i32_0 = arith.constant 0 : i32
    return %arg0, %c0_i32 : i32, i32
  }
  func.func @transform_2(%arg0: i32) -> (i32, i32) {
    %c0_i32 = arith.constant 0 : i32
    %c0_i32_0 = arith.constant 0 : i32
    return %arg0, %c0_i32 : i32, i32
  }
}

</mosaic_0001>

<llo_original>
// kernel: custom-call
$region0: #{custom-call}
  %s0 = inlined_call_operand.hbm [shape: c64[2,4,16,16], index: 0, kind: input, shape index: {}]
  %s1 = inlined_call_operand.vmem [shape: f32[2,4,16,16], index: 1, kind: output, shape index: {}]
  $region1: #{custom-call} parent=0
    #allocation0 [shape = 's32[1]{0}', space=sflag, size = 0x4, scoped, tag = 'scoped memory for custom-call']
    %2 = vsyncpa [#allocation0], 0
    %s3 = sshll.u32 %s1, 4
    %s4 = int_to_ptr.vmem [resolvable:$true] %s3
    %6 = dma.hbm_to_vmem [thread:$0]  %s0, 2048, %s4, [#allocation0]
    %7 = dma.done [#allocation0], 2048
    %8 = vsyncpa [#allocation0], 1

// kernel: custom-call.1
$region0: #{custom-call.1}
  %s0 = inlined_call_operand.hbm [shape: c64[2,4,16,16], index: 0, kind: input, shape index: {}]
  %s1 = inlined_call_operand.vmem [shape: f32[2,4,16,16], index: 1, kind: output, shape index: {}]
  %s2 = scalar_lea.hbm %s0, 2048
  $region1: #{custom-call.1} parent=0
    #allocation0 [shape = 's32[1]{0}', space=sflag, size = 0x4, scoped, tag = 'scoped memory for custom-call.1']
    %3 = vsyncpa [#allocation0], 0
    %s4 = sshll.u32 %s1, 4
    %s5 = int_to_ptr.vmem [resolvable:$true] %s4
    %7 = dma.hbm_to_vmem [thread:$0]  %s2, 2048, %s5, [#allocation0]
    %8 = dma.done [#allocation0], 2048
    %9 = vsyncpa [#allocation0], 1

// kernel: _lambda_.1
$region0: #{_lambda_.1}
  #allocation0 [shape = 'u32[]', space=smem, size = 0x4, offset = 0x4, fixed_abs, tag = 'smem constant byte address 0x4 - core index']
  #allocation1 [shape = 'u32[144,128]{1,0:T(1,128)}', space=vmem, size = 0x12000, scoped, tag = 'internal scratch']
  %s0 = inlined_call_operand.vmem [shape: f32[16,512], index: 0, kind: input, shape index: {}, may-alias: {0,2}]
  %s1 = inlined_call_operand.vmem [shape: f32[16,512], index: 1, kind: input, shape index: {}]
  %s2 = inlined_call_operand.vmem [shape: f32[16,512], index: 2, kind: output, shape index: {}, may-alias: {0,2}]
  %s3 = sld [smem:[#allocation0]]
  $region18: #{_lambda_.1} parent=0
    _
  %s5 = ssub.s32 1, %s3
  %s6 = scalar_select 0, %s5, %s3
  // Predicated region
  $region2: #{_lambda_.1} parent=0 // pred_check
    _
  $region3: #{_lambda_.1} parent=0 // pred_check_branch
    %8 = sbr.rel (0) target = $region5
  $region4: #{_lambda_.1} parent=0 // pred_region
    _
  $region5: #{_lambda_.1} parent=0 // pred_fallthru
    _
  // Predicated region
  $region6: #{_lambda_.1} parent=0 // pred_check
    _
  $region7: #{_lambda_.1} parent=0 // pred_check_branch
    %10 = sbr.rel (0) target = $region9
  $region8: #{_lambda_.1} parent=0 // pred_region
    _
  $region9: #{_lambda_.1} parent=0 // pred_fallthru
    _
  %v11 = vld [vmem:[%s0] sm:$0xff]
  %v12 = vld [vmem:[%s0 + $0x8] sm:$0xff]
  %v13 = vld [vmem:[%s0 + $0x10] sm:$0xff]
  %v14 = vld [vmem:[%s0 + $0x18] sm:$0xff]
  %v15 = vld [vmem:[%s0 + $0x20] sm:$0xff]
  %v16 = vld [vmem:[%s0 + $0x28] sm:$0xff]
  %v17 = vld [vmem:[%s0 + $0x30] sm:$0xff]
  %v18 = vld [vmem:[%s0 + $0x38] sm:$0xff]
  %v19 = vld [vmem:[%s1] sm:$0xff]
  %v20 = vld [vmem:[%s1 + $0x8] sm:$0xff]
  %v21 = vld [vmem:[%s1 + $0x10] sm:$0xff]
  %v22 = vld [vmem:[%s1 + $0x18] sm:$0xff]
  %v23 = vld [vmem:[%s1 + $0x20] sm:$0xff]
  %v24 = vld [vmem:[%s1 + $0x28] sm:$0xff]
  %v25 = vld [vmem:[%s1 + $0x30] sm:$0xff]
  %v26 = vld [vmem:[%s1 + $0x38] sm:$0xff]
  %27 = vrot.lane.b32.xlu0 %v11, 127
  %v28 = vpop.permute.xlu0 %27
  %29 = vrot.lane.b32.xlu0 %v15, 127
  %v30 = vpop.permute.xlu0 %29
  %31 = vrot.lane.b32.xlu0 %v12, 127
  %v32 = vpop.permute.xlu0 %31
  %33 = vrot.lane.b32.xlu0 %v16, 127
  %v34 = vpop.permute.xlu0 %33
  %35 = vrot.lane.b32.xlu0 %v13, 127
  %v36 = vpop.permute.xlu0 %35
  %37 = vrot.lane.b32.xlu0 %v17, 127
  %v38 = vpop.permute.xlu0 %37
  %39 = vrot.lane.b32.xlu0 %v14, 127
  %v40 = vpop.permute.xlu0 %39
  %41 = vrot.lane.b32.xlu0 %v18, 127
  %v42 = vpop.permute.xlu0 %41
  %v43 = vlaneseq
  %v44 = vand.u32 %v43, 127
  %vm45 = vcmp.lt.s32.totalorder %v44, 127
  %v46 = vsel %vm45, %v36, %v40
  %v47 = vsel %vm45, %v38, %v42
  %v48 = vsel %vm45, %v32, %v36
  %v49 = vsel %vm45, %v34, %v38
  %v50 = vsel %vm45, %v28, %v32
  %v51 = vsel %vm45, %v30, %v34
  %v52 = vsel %vm45, %v40, %v28
  %v53 = vsel %vm45, %v42, %v30
  %54 = vrot.lane.b32.xlu0 %v19, 127
  %v55 = vpop.permute.xlu0 %54
  %56 = vrot.lane.b32.xlu0 %v23, 127
  %v57 = vpop.permute.xlu0 %56
  %58 = vrot.lane.b32.xlu0 %v20, 127
  %v59 = vpop.permute.xlu0 %58
  %60 = vrot.lane.b32.xlu0 %v24, 127
  %v61 = vpop.permute.xlu0 %60
  %62 = vrot.lane.b32.xlu0 %v21, 127
  %v63 = vpop.permute.xlu0 %62
  %64 = vrot.lane.b32.xlu0 %v25, 127
  %v65 = vpop.permute.xlu0 %64
  %66 = vrot.lane.b32.xlu0 %v22, 127
  %v67 = vpop.permute.xlu0 %66
  %68 = vrot.lane.b32.xlu0 %v26, 127
  %v69 = vpop.permute.xlu0 %68
  %v70 = vsel %vm45, %v63, %v67
  %v71 = vsel %vm45, %v65, %v69
  %v72 = vsel %vm45, %v59, %v63
  %v73 = vsel %vm45, %v61, %v65
  %v74 = vsel %vm45, %v55, %v59
  %v75 = vsel %vm45, %v57, %v61
  %v76 = vsel %vm45, %v67, %v55
  %v77 = vsel %vm45, %v69, %v57
  %78 = vrot.lane.b32.xlu0 %v11, 1
  %v79 = vpop.permute.xlu0 %78
  %80 = vrot.lane.b32.xlu0 %v15, 1
  %v81 = vpop.permute.xlu0 %80
  %82 = vrot.lane.b32.xlu0 %v12, 1
  %v83 = vpop.permute.xlu0 %82
  %84 = vrot.lane.b32.xlu0 %v16, 1
  %v85 = vpop.permute.xlu0 %84
  %86 = vrot.lane.b32.xlu0 %v13, 1
  %v87 = vpop.permute.xlu0 %86
  %88 = vrot.lane.b32.xlu0 %v17, 1
  %v89 = vpop.permute.xlu0 %88
  %90 = vrot.lane.b32.xlu0 %v14, 1
  %v91 = vpop.permute.xlu0 %90
  %92 = vrot.lane.b32.xlu0 %v18, 1
  %v93 = vpop.permute.xlu0 %92
  %vm94 = vcmp.lt.s32.totalorder %v44, 1
  %v95 = vsel %vm94, %v87, %v91
  %v96 = vsel %vm94, %v89, %v93
  %v97 = vsel %vm94, %v83, %v87
  %v98 = vsel %vm94, %v85, %v89
  %v99 = vsel %vm94, %v79, %v83
  %v100 = vsel %vm94, %v81, %v85
  %v101 = vsel %vm94, %v91, %v79
  %v102 = vsel %vm94, %v93, %v81
  %103 = vrot.lane.b32.xlu0 %v19, 1
  %v104 = vpop.permute.xlu0 %103
  %105 = vrot.lane.b32.xlu0 %v23, 1
  %v106 = vpop.permute.xlu0 %105
  %107 = vrot.lane.b32.xlu0 %v20, 1
  %v108 = vpop.permute.xlu0 %107
  %109 = vrot.lane.b32.xlu0 %v24, 1
  %v110 = vpop.permute.xlu0 %109
  %111 = vrot.lane.b32.xlu0 %v21, 1
  %v112 = vpop.permute.xlu0 %111
  %113 = vrot.lane.b32.xlu0 %v25, 1
  %v114 = vpop.permute.xlu0 %113
  %115 = vrot.lane.b32.xlu0 %v22, 1
  %v116 = vpop.permute.xlu0 %115
  %117 = vrot.lane.b32.xlu0 %v26, 1
  %v118 = vpop.permute.xlu0 %117
  %v119 = vsel %vm94, %v112, %v116
  %v120 = vsel %vm94, %v114, %v118
  %v121 = vsel %vm94, %v108, %v112
  %v122 = vsel %vm94, %v110, %v114
  %v123 = vsel %vm94, %v104, %v108
  %v124 = vsel %vm94, %v106, %v110
  %v125 = vsel %vm94, %v116, %v104
  %v126 = vsel %vm94, %v118, %v106
  %v127 = vadd.s32 %v44, 128
  %v128 = vadd.s32 %v44, 256
  %v129 = vadd.s32 %v44, 384
  %v130 = vand.u32 %v44, 1
  %v131 = vand.u32 %v127, 1
  %v132 = vand.u32 %v128, 1
  %v133 = vand.u32 %v129, 1
  %vm134 = vcmp.eq.s32.totalorder %v130, 0
  %vm135 = vcmp.eq.s32.totalorder %v131, 0
  %vm136 = vcmp.eq.s32.totalorder %v132, 0
  %vm137 = vcmp.eq.s32.totalorder %v133, 0
  %v138 = vmul.f32 %v11, %v19
  %v139 = vmul.f32 %v12, %v20
  %v140 = vmul.f32 %v13, %v21
  %v141 = vmul.f32 %v14, %v22
  %v142 = vmul.f32 %v15, %v23
  %v143 = vmul.f32 %v16, %v24
  %v144 = vmul.f32 %v17, %v25
  %v145 = vmul.f32 %v18, %v26
  %v146 = vmul.f32 %v50, %v74
  %v147 = vmul.f32 %v48, %v72
  %v148 = vmul.f32 %v46, %v70
  %v149 = vmul.f32 %v52, %v76
  %v150 = vmul.f32 %v51, %v75
  %v151 = vmul.f32 %v49, %v73
  %v152 = vmul.f32 %v47, %v71
  %v153 = vmul.f32 %v53, %v77
  %v154 = vsub.f32 %v138, %v146
  %v155 = vsub.f32 %v139, %v147
  %v156 = vsub.f32 %v140, %v148
  %v157 = vsub.f32 %v141, %v149
  %v158 = vsub.f32 %v142, %v150
  %v159 = vsub.f32 %v143, %v151
  %v160 = vsub.f32 %v144, %v152
  %v161 = vsub.f32 %v145, %v153
  %v162 = vmul.f32 %v101, %v19
  %v163 = vmul.f32 %v99, %v20
  %v164 = vmul.f32 %v97, %v21
  %v165 = vmul.f32 %v95, %v22
  %v166 = vmul.f32 %v102, %v23
  %v167 = vmul.f32 %v100, %v24
  %v168 = vmul.f32 %v98, %v25
  %v169 = vmul.f32 %v96, %v26
  %v170 = vmul.f32 %v11, %v125
  %v171 = vmul.f32 %v12, %v123
  %v172 = vmul.f32 %v13, %v121
  %v173 = vmul.f32 %v14, %v119
  %v174 = vmul.f32 %v15, %v126
  %v175 = vmul.f32 %v16, %v124
  %v176 = vmul.f32 %v17, %v122
  %v177 = vmul.f32 %v18, %v120
  %v178 = vadd.f32 %v162, %v170
  %v179 = vadd.f32 %v163, %v171
  %v180 = vadd.f32 %v164, %v172
  %v181 = vadd.f32 %v165, %v173
  %v182 = vadd.f32 %v166, %v174
  %v183 = vadd.f32 %v167, %v175
  %v184 = vadd.f32 %v168, %v176
  %v185 = vadd.f32 %v169, %v177
  %v186 = vsel %vm134, %v154, %v178
  %v187 = vsel %vm135, %v155, %v179
  %v188 = vsel %vm136, %v156, %v180
  %v189 = vsel %vm137, %v157, %v181
  %v190 = vsel %vm134, %v158, %v182
  %v191 = vsel %vm135, %v159, %v183
  %v192 = vsel %vm136, %v160, %v184
  %v193 = vsel %vm137, %v161, %v185
  %194 = vst [vmem:[%s2] sm:$0xff] %v186
  %195 = vst [vmem:[%s2 + $0x8] sm:$0xff] %v187
  %196 = vst [vmem:[%s2 + $0x10] sm:$0xff] %v188
  %197 = vst [vmem:[%s2 + $0x18] sm:$0xff] %v189
  %198 = vst [vmem:[%s2 + $0x20] sm:$0xff] %v190
  %199 = vst [vmem:[%s2 + $0x28] sm:$0xff] %v191
  %200 = vst [vmem:[%s2 + $0x30] sm:$0xff] %v192
  %201 = vst [vmem:[%s2 + $0x38] sm:$0xff] %v193
  // Predicated region
  $region10: #{_lambda_.1} parent=0 // pred_check
    _
  $region11: #{_lambda_.1} parent=0 // pred_check_branch
    %203 = sbr.rel (0) target = $region13
  $region12: #{_lambda_.1} parent=0 // pred_region
    _
  $region13: #{_lambda_.1} parent=0 // pred_fallthru
    _
  // Predicated region
  $region14: #{_lambda_.1} parent=0 // pred_check
    _
  $region15: #{_lambda_.1} parent=0 // pred_check_branch
    %205 = sbr.rel (0) target = $region17
  $region16: #{_lambda_.1} parent=0 // pred_region
    _
  $region17: #{_lambda_.1} parent=0 // pred_fallthru
    _

// kernel: custom-call.4
$region0: #{custom-call.4}
  %s0 = inlined_call_operand.vmem [shape: f32[2,4,16,16], index: 0, kind: input, shape index: {}]
  %s1 = inlined_call_operand.vmem [shape: f32[2,4,16,16], index: 1, kind: input, shape index: {}]
  %s2 = inlined_call_operand.hbm [shape: c64[2,4,16,16], index: 2, kind: output, shape index: {}]
  %s3 = scalar_lea.hbm %s2, 2048
  $region1: #{custom-call.4} parent=0
    #allocation0 [shape = 's32[1]{0}', space=sflag, size = 0x4, scoped, tag = 'scoped memory for custom-call.4']
    %4 = vsyncpa [#allocation0], 0
    %s5 = sshll.u32 %s0, 4
    %s6 = int_to_ptr.vmem [resolvable:$true] %s5
    %8 = dma.vmem_to_hbm [thread:$0]  %s6, 2048, %s2, [#allocation0]
    %9 = dma.done [#allocation0], 2048
    %10 = vsyncpa [#allocation0], 1
  $region2: #{custom-call.4} parent=0
    #allocation1 [shape = 's32[1]{0}', space=sflag, size = 0x4, scoped, tag = 'scoped memory for custom-call.4']
    %11 = vsyncpa [#allocation1], 0
    %s12 = sshll.u32 %s1, 4
    %s13 = int_to_ptr.vmem [resolvable:$true] %s12
    %15 = dma.vmem_to_hbm [thread:$0]  %s13, 2048, %s3, [#allocation1]
    %16 = dma.done [#allocation1], 2048
    %17 = vsyncpa [#allocation1], 1

</llo_original>
